<compile_context>
chip_gen: v7x
topology: tpu7x:2x2x1
jax: 0.10.0
libtpu: 0.0.40
codegen_flags: <defaults>
</compile_context>

<pallas_src>
import functools

import jax
import jax.numpy as jnp
from jax import lax
from jax.experimental import pallas as pl
from jax.experimental.pallas import tpu as pltpu


# ----------------------------------------------------------------------------
# Kernels
# ----------------------------------------------------------------------------
def _rbf_gram_kernel_single(gamma_ref, x_ref, y_ref, xsq_ref, ysq_ref, o_ref):
    """Single reduction step: x_ref (D, tm), y_ref (D, tn) -> o_ref (tm, tn)."""
    # Contract the leading D axis directly on the MXU (no wrapper transpose).
    dot = lax.dot_general(
        x_ref[...], y_ref[...],
        dimension_numbers=(((0,), (0,)), ((), ())),
        preferred_element_type=jnp.float32)                       # (tm, tn)
    # Precomputed column norms: xsq (tm, 1), ysq (1, tn).
    sqd = jnp.maximum(xsq_ref[...] + ysq_ref[...] - 2.0 * dot, 0.0)
    o_ref[...] = jnp.exp(-gamma_ref[0] * sqd).astype(o_ref.dtype)


def _rbf_gram_kernel_multi(gamma_ref, x_ref, y_ref, xsq_ref, ysq_ref, o_ref,
                           *, compute_dtype):
    """k-tiled reduction, k last/'arbitrary'.  Cross-term accumulates directly
    into the resident f32 output block (no scratch accumulator)."""
    k = pl.program_id(2)

    @pl.when(k == 0)
    def _():
        o_ref[...] = jnp.zeros_like(o_ref)

    a = x_ref[...].astype(compute_dtype)        # (tk, tm)
    b = y_ref[...].astype(compute_dtype)        # (tk, tn)
    o_ref[...] += lax.dot_general(
        a, b, dimension_numbers=(((0,), (0,)), ((), ())),
        preferred_element_type=jnp.float32)

    @pl.when(k == pl.num_programs(2) - 1)
    def _():
        sqd = jnp.maximum(xsq_ref[...] + ysq_ref[...] - 2.0 * o_ref[...], 0.0)
        o_ref[...] = jnp.exp(-gamma_ref[0] * sqd)


def _rbf_from_dist_kernel(gamma_ref, d_ref, o_ref):
    """Elementwise path when pair_dist is supplied directly."""
    sqd = jnp.maximum(d_ref[...], 0.0)          # clamp negative round-off
    o_ref[...] = jnp.exp(-gamma_ref[0] * sqd).astype(o_ref.dtype)


# ----------------------------------------------------------------------------
# Helpers
# ----------------------------------------------------------------------------
def _gamma_array(sigma):
    sigma = jnp.asarray(sigma, dtype=jnp.float32)
    return (1.0 / (2.0 * sigma * sigma)).reshape((1,))


def _pick_tile(dim, target, align):
    """Largest `align`-aligned divisor of `dim` that is <= target (or dim)."""
    if dim <= target:
        return dim
    t = (target // align) * align
    while t >= align:
        if dim % t == 0:
            return t
        t -= align
    return dim  # no aligned divisor; fall back to full extent


_VMEM_BUDGET = 24 << 20   # conservative double-buffered budget; fits all gens


# ----------------------------------------------------------------------------
# Wrappers
# ----------------------------------------------------------------------------
def rbf_gram(X, Y=None, sigma=1.0, *, tm=None, tn=None, tk_max=1024,
             out_dtype=jnp.float32, use_bf16_dot=False):
    """exp(-||x_i - y_j||^2 / (2 sigma^2)) for columns of X (D, M), Y (D, N)."""
    self_gram = Y is None
    X = X.astype(jnp.float32)
    Y = X if self_gram else Y.astype(jnp.float32)
    D, M = X.shape
    D2, N = Y.shape
    assert D == D2, "X and Y must share the feature (row) dimension"

    gamma = _gamma_array(sigma)
    out_bytes = jnp.dtype(out_dtype).itemsize

    # Column norms computed once (O(D*(M+N))), streamed as tiny side inputs.
    xsq = jnp.sum(X * X, axis=0).reshape(M, 1)
    ysq = xsq.reshape(1, M) if self_gram else jnp.sum(Y * Y, axis=0).reshape(1, N)

    # ---- tile selection (lane dims must be x128-aligned or full extent) ----
    tm_t = tm if tm is not None else 512
    tn_t = tn if tn is not None else (2048 if D <= 128 else 1024)
    tm = _pick_tile(M, tm_t, 128)
    tn = _pick_tile(N, tn_t, 128)

    def _footprint(tm_, tn_):
        d_ = min(D, tk_max)
        return (2 * 4 * d_ * (tm_ + tn_)        # X, Y tiles (double-buffered)
                + 2 * out_bytes * tm_ * tn_     # output tile (double-buffered)
                + 2 * 4 * (tm_ + tn_))          # norm tiles

    while _footprint(tm, tn) > _VMEM_BUDGET and max(tm_t, tn_t) > 128:
        if tn_t >= tm_t:
            tn_t //= 2
        else:
            tm_t //= 2
        tm = _pick_tile(M, tm_t, 128)
        tn = _pick_tile(N, tn_t, 128)

    gi, gj = M // tm, N // tn

    # Grid order: make the matrix with the larger tile the resident one
    # (fewer HBM re-reads); prefer >=2 blocks on the leading parallel axis so
    # v7x's two TensorCores both get work.
    j_outer = gj * M <= gi * N
    if j_outer and gj < 2 and gi >= 2:
        j_outer = False
    elif (not j_outer) and gi < 2 and gj >= 2:
        j_outer = True

    vmem_limit = int(min(56 << 20, max(32 << 20, _footprint(tm, tn) + (4 << 20))))

    cost = pl.CostEstimate(
        flops=2 * M * N * D + 4 * M * N,
        transcendentals=M * N,
        bytes_accessed=4 * D * (M + N) + out_bytes * M * N,
    )

    if D <= tk_max:
        # ---- single reduction step: no scratch, fused exp epilogue ----
        if j_outer:
            grid = (gj, gi)
            x_map = lambda j, i: (0, i)
            y_map = lambda j, i: (0, j)
            xs_map = lambda j, i: (i, 0)
            ys_map = lambda j, i: (0, j)
            o_map = lambda j, i: (i, j)
        else:
            grid = (gi, gj)
            x_map = lambda i, j: (0, i)
            y_map = lambda i, j: (0, j)
            xs_map = lambda i, j: (i, 0)
            ys_map = lambda i, j: (0, j)
            o_map = lambda i, j: (i, j)
        return pl.pallas_call(
            _rbf_gram_kernel_single,
            out_shape=jax.ShapeDtypeStruct((M, N), out_dtype),
            grid_spec=pltpu.PrefetchScalarGridSpec(
                num_scalar_prefetch=0,
                grid=grid,
                in_specs=[
                    pl.BlockSpec(memory_space=pltpu.MemorySpace.SMEM),  # gamma
                    pl.BlockSpec((D, tm), x_map),                       # X tile
                    pl.BlockSpec((D, tn), y_map),                       # Y tile
                    pl.BlockSpec((tm, 1), xs_map),                      # ||x||^2
                    pl.BlockSpec((1, tn), ys_map),                      # ||y||^2
                ],
                out_specs=pl.BlockSpec((tm, tn), o_map),
            ),
            compiler_params=pltpu.CompilerParams(
                dimension_semantics=("parallel", "parallel"),
                vmem_limit_bytes=vmem_limit),
            cost_estimate=cost,
        )(gamma, X, Y, xsq, ysq)

    # ---- large D: k-tiled reduction, accumulate straight into o_ref ----
    tk = _pick_tile(D, tk_max, 8)
    gk = D // tk
    kernel = functools.partial(
        _rbf_gram_kernel_multi,
        compute_dtype=jnp.bfloat16 if use_bf16_dot else jnp.float32)
    if j_outer:
        grid = (gj, gi, gk)
        x_map = lambda j, i, k: (k, i)
        y_map = lambda j, i, k: (k, j)
        xs_map = lambda j, i, k: (i, 0)
        ys_map = lambda j, i, k: (0, j)
        o_map = lambda j, i, k: (i, j)
    else:
        grid = (gi, gj, gk)
        x_map = lambda i, j, k: (k, i)
        y_map = lambda i, j, k: (k, j)
        xs_map = lambda i, j, k: (i, 0)
        ys_map = lambda i, j, k: (0, j)
        o_map = lambda i, j, k: (i, j)
    out = pl.pallas_call(
        kernel,
        out_shape=jax.ShapeDtypeStruct((M, N), jnp.float32),
        grid_spec=pltpu.PrefetchScalarGridSpec(
            num_scalar_prefetch=0,
            grid=grid,
            in_specs=[
                pl.BlockSpec(memory_space=pltpu.MemorySpace.SMEM),      # gamma
                pl.BlockSpec((tk, tm), x_map),
                pl.BlockSpec((tk, tn), y_map),
                pl.BlockSpec((tm, 1), xs_map),
                pl.BlockSpec((1, tn), ys_map),
            ],
            out_specs=pl.BlockSpec((tm, tn), o_map),
        ),
        compiler_params=pltpu.CompilerParams(
            dimension_semantics=("parallel", "parallel", "arbitrary"),
            vmem_limit_bytes=vmem_limit),
        cost_estimate=cost,
    )(gamma, X, Y, xsq, ysq)
    # k-accumulation stays f32 in VMEM; narrow output dtype applied afterwards.
    return out if out_dtype == jnp.float32 else out.astype(out_dtype)


def rbf_from_pair_dist(pair_dist, sigma=1.0, *, tr=512, tc=2048,
                       out_dtype=jnp.float32):
    """exp(-gamma * max(pair_dist, 0)) when squared pairwise distances are given."""
    pair_dist = pair_dist.astype(jnp.float32)
    R, C = pair_dist.shape
    tr = _pick_tile(R, tr, 8)
    tc = _pick_tile(C, tc, 128)
    gamma = _gamma_array(sigma)
    out_bytes = jnp.dtype(out_dtype).itemsize
    need = 2 * (4 + out_bytes) * tr * tc + (1 << 20)
    vmem_limit = int(min(56 << 20, max(32 << 20, need)))
    cost = pl.CostEstimate(
        flops=2 * R * C,
        transcendentals=R * C,
        bytes_accessed=(4 + out_bytes) * R * C,
    )
    return pl.pallas_call(
        _rbf_from_dist_kernel,
        out_shape=jax.ShapeDtypeStruct((R, C), out_dtype),
        grid_spec=pltpu.PrefetchScalarGridSpec(
            num_scalar_prefetch=0,
            grid=(R // tr, C // tc),
            in_specs=[
                pl.BlockSpec(memory_space=pltpu.MemorySpace.SMEM),
                pl.BlockSpec((tr, tc), lambda i, j: (i, j)),
            ],
            out_specs=pl.BlockSpec((tr, tc), lambda i, j: (i, j)),
        ),
        compiler_params=pltpu.CompilerParams(
            dimension_semantics=("parallel", "parallel"),
            vmem_limit_bytes=vmem_limit),
        cost_estimate=cost,
    )(gamma, pair_dist)


# ----------------------------------------------------------------------------
# Self-check
# ----------------------------------------------------------------------------
if __name__ == "__main__":
    key = jax.random.PRNGKey(0)
    kx, ky = jax.random.split(key)

    # Points are columns: X is (D, M), Y is (D, N).
    D, M, N = 64, 256, 128
    X = jax.random.normal(kx, (D, M), dtype=jnp.float32)
    Y = jax.random.normal(ky, (D, N), dtype=jnp.float32)
    sigma = 8.0
    gamma = 1.0 / (2.0 * sigma * sigma)

    def ref_gram(A, B):
        d = jnp.sum((A[:, :, None] - B[:, None, :]) ** 2, axis=0)
        return jnp.exp(-gamma * d)

    # Case 1: Gram matrix of X with itself (Y is None).
    out_xx = rbf_gram(X, sigma=sigma)
    # Case 2: Gram matrix between X and Y (single-reduction path).
    out_xy = rbf_gram(X, Y, sigma=sigma)
    # Case 3: force the k-tiled multi path (small tk_max) for coverage.
    out_xy_k = rbf_gram(X, Y, sigma=sigma, tk_max=32)
    jax.block_until_ready((out_xx, out_xy, out_xy_k))

    ref_xx = ref_gram(X, X)
    ref_xy = ref_gram(X, Y)
    assert out_xx.shape == (M, M) and out_xy.shape == (M, N)
    assert jnp.allclose(out_xx, ref_xx, rtol=1e-4, atol=1e-5)
    assert jnp.allclose(out_xy, ref_xy, rtol=1e-4, atol=1e-5)
    assert jnp.allclose(out_xy_k, ref_xy, rtol=1e-4, atol=1e-5)

    # Case 4: pair_dist supplied directly (elementwise RBF).
    pd = jnp.sum((X[:, :, None] - Y[:, None, :]) ** 2, axis=0)
    out_pd = rbf_from_pair_dist(pd, sigma=sigma)
    jax.block_until_ready(out_pd)
    assert jnp.allclose(out_pd, jnp.exp(-gamma * pd), rtol=1e-5, atol=1e-6)

    print("KERNEL_OK")
</pallas_src>

<mosaic_0001>
module attributes {stable_mosaic.version = 11 : i64} {
  func.func @_rbf_gram_kernel_single(%arg0: i32, %arg1: i32, %arg2: memref<1xf32, #tpu.memory_space<smem>>, %arg3: memref<64x256xf32, #tpu.memory_space<vmem>>, %arg4: memref<64x256xf32, #tpu.memory_space<vmem>>, %arg5: memref<256x1xf32, #tpu.memory_space<vmem>>, %arg6: memref<1x256xf32, #tpu.memory_space<vmem>>, %arg7: memref<256x256xf32, #tpu.memory_space<vmem>>) attributes {dimension_semantics = [#tpu.dimension_semantics<parallel>, #tpu.dimension_semantics<parallel>], iteration_bounds = array<i64: 1, 1>, scalar_prefetch = 0 : i64, scratch_operands = 0 : i64, tpu.core_type = #tpu.core_type<tc>, window_params = [{transform_indices = @transform_0, window_bounds = array<i64: 1>}, {transform_indices = @transform_1, window_bounds = array<i64: 64, 256>}, {transform_indices = @transform_2, window_bounds = array<i64: 64, 256>}, {transform_indices = @transform_3, window_bounds = array<i64: 256, 1>}, {transform_indices = @transform_4, window_bounds = array<i64: 1, 256>}, {transform_indices = @transform_5, window_bounds = array<i64: 256, 256>}]} {
    %c0 = arith.constant 0 : index
    %c0_0 = arith.constant 0 : index
    %0 = vector.load %arg3[%c0, %c0_0] : memref<64x256xf32, #tpu.memory_space<vmem>>, vector<64x256xf32>
    %c0_1 = arith.constant 0 : index
    %c0_2 = arith.constant 0 : index
    %1 = vector.load %arg4[%c0_1, %c0_2] : memref<64x256xf32, #tpu.memory_space<vmem>>, vector<64x256xf32>
    %cst = arith.constant dense<0.000000e+00> : vector<256x256xf32>
    %2 = tpu.matmul %0, %1, %cst {dimension_numbers = #tpu.dot_dimension_numbers<[0], [0], [1], [1], [0, 1, 1, 1], [], []>} : vector<64x256xf32>, vector<64x256xf32>, vector<256x256xf32> -> vector<256x256xf32>
    %c0_3 = arith.constant 0 : index
    %c0_4 = arith.constant 0 : index
    %3 = vector.load %arg5[%c0_3, %c0_4] : memref<256x1xf32, #tpu.memory_space<vmem>>, vector<256x1xf32>
    %c0_5 = arith.constant 0 : index
    %c0_6 = arith.constant 0 : index
    %4 = vector.load %arg6[%c0_5, %c0_6] : memref<1x256xf32, #tpu.memory_space<vmem>>, vector<1x256xf32>
    %5 = vector.broadcast %3 : vector<256x1xf32> to vector<256x256xf32>
    %6 = vector.broadcast %4 : vector<1x256xf32> to vector<256x256xf32>
    %7 = arith.addf %5, %6 : vector<256x256xf32>
    %cst_7 = arith.constant 2.000000e+00 : f32
    %8 = vector.broadcast %cst_7 : f32 to vector<256x256xf32>
    %9 = arith.mulf %8, %2 : vector<256x256xf32>
    %10 = arith.subf %7, %9 : vector<256x256xf32>
    %cst_8 = arith.constant 0.000000e+00 : f32
    %11 = vector.broadcast %cst_8 : f32 to vector<256x256xf32>
    %12 = arith.maximumf %10, %11 : vector<256x256xf32>
    %c0_9 = arith.constant 0 : index
    %13 = memref.load %arg2[%c0_9] : memref<1xf32, #tpu.memory_space<smem>>
    %cst_10 = arith.constant 0.000000e+00 : f32
    %14 = arith.subf %cst_10, %13 : f32
    %15 = vector.broadcast %14 : f32 to vector<256x256xf32>
    %16 = arith.mulf %15, %12 : vector<256x256xf32>
    %17 = math.exp %16 : vector<256x256xf32>
    %c0_11 = arith.constant 0 : index
    %c0_12 = arith.constant 0 : index
    %18 = vector.load %arg7[%c0_11, %c0_12] : memref<256x256xf32, #tpu.memory_space<vmem>>, vector<256x256xf32>
    tpu.vector_store %arg7[%c0_11, %c0_12], %17 {strides = array<i32>} : memref<256x256xf32, #tpu.memory_space<vmem>>, vector<256x256xf32>,
    return
  }
  func.func @transform_0(%arg0: i32, %arg1: i32) -> i32 {
    %c0_i32 = arith.constant 0 : i32
    %c0_i32_0 = arith.constant 0 : i32
    return %c0_i32 : i32
  }
  func.func @transform_1(%arg0: i32, %arg1: i32) -> (i32, i32) {
    %c0_i32 = arith.constant 0 : i32
    %c0_i32_0 = arith.constant 0 : i32
    return %c0_i32, %arg1 : i32, i32
  }
  func.func @transform_2(%arg0: i32, %arg1: i32) -> (i32, i32) {
    %c0_i32 = arith.constant 0 : i32
    %c0_i32_0 = arith.constant 0 : i32
    return %c0_i32, %arg0 : i32, i32
  }
  func.func @transform_3(%arg0: i32, %arg1: i32) -> (i32, i32) {
    %c0_i32 = arith.constant 0 : i32
    %c0_i32_0 = arith.constant 0 : i32
    return %arg1, %c0_i32 : i32, i32
  }
  func.func @transform_4(%arg0: i32, %arg1: i32) -> (i32, i32) {
    %c0_i32 = arith.constant 0 : i32
    %c0_i32_0 = arith.constant 0 : i32
    return %c0_i32, %arg0 : i32, i32
  }
  func.func @transform_5(%arg0: i32, %arg1: i32) -> (i32, i32) {
    %c0_i32 = arith.constant 0 : i32
    return %arg1, %arg0 : i32, i32
  }
}

</mosaic_0001>

<llo_original>
// kernel: tpu_custom_call.1
$region0: #{tpu_custom_call.1}
  #allocation0 [shape = 'u32[]', space=smem, size = 0x4, offset = 0x4, fixed_abs, tag = 'smem constant byte address 0x4 - core index']
  #allocation1 [shape = 'u32[144,128]{1,0:T(1,128)}', space=vmem, size = 0x12000, scoped, tag = 'internal scratch']
  #allocation2 [shape = 'f32[1]{0:T(128)S(6)}', space=smem, size = 0x200, scoped, tag = 'scoped memory for tpu_custom_call.1']
  %s0 = inlined_call_operand.<no memory space> [shape: f32[1], index: 0, kind: input, shape index: {}]
  %s1 = inlined_call_operand.vmem [shape: f32[64,256], index: 1, kind: input, shape index: {}]
  %s2 = inlined_call_operand.vmem [shape: f32[64,256], index: 2, kind: input, shape index: {}]
  %s3 = inlined_call_operand.vmem [shape: f32[256,1], index: 3, kind: input, shape index: {}]
  %s4 = inlined_call_operand.vmem [shape: f32[1,256], index: 4, kind: input, shape index: {}]
  %s5 = inlined_call_operand.hbm [shape: f32[256,256], index: 5, kind: output, shape index: {}]
  %s6 = sld [smem:[#allocation0]]
  $region30: #{tpu_custom_call.1} parent=0
    _
  %s8 = ssub.s32 1, %s6
  %s9 = scalar_select 0, %s8, %s6
  %10 = sst [smem:[#allocation2]] %s0
  $region1: #{tpu_custom_call.1} parent=0
    #allocation3 [shape = 'u8[262144]{0}', space=vmem, size = 0x40000, scoped, tag = 'output window, operand 0, single buffered']
    #allocation4 [shape = 's32[1]{0}', space=sflag, size = 0x4, scoped, tag = 'scoped memory for tpu_custom_call.1']
    %11 = vsyncpa [#allocation4], 0
    // Predicated region
    $region2: #{tpu_custom_call.1} parent=1 // pred_check
      _
    $region3: #{tpu_custom_call.1} parent=1 // pred_check_branch
      %13 = sbr.rel (0) target = $region5
    $region4: #{tpu_custom_call.1} parent=1 // pred_region
      _
    $region5: #{tpu_custom_call.1} parent=1 // pred_fallthru
      _
    // Predicated region
    $region6: #{tpu_custom_call.1} parent=1 // pred_check
      _
    $region7: #{tpu_custom_call.1} parent=1 // pred_check_branch
      %15 = sbr.rel (0) target = $region9
    $region8: #{tpu_custom_call.1} parent=1 // pred_region
      _
    $region9: #{tpu_custom_call.1} parent=1 // pred_fallthru
      _
    // Predicated region
    $region10: #{tpu_custom_call.1} parent=1 // pred_check
      _
    $region11: #{tpu_custom_call.1} parent=1 // pred_check_branch
      %17 = sbr.rel (0) target = $region13
    $region12: #{tpu_custom_call.1} parent=1 // pred_region
      _
    $region13: #{tpu_custom_call.1} parent=1 // pred_fallthru
      _
    // Predicated region
    $region14: #{tpu_custom_call.1} parent=1 // pred_check
      _
    $region15: #{tpu_custom_call.1} parent=1 // pred_check_branch
      %19 = sbr.rel (0) target = $region17
    $region16: #{tpu_custom_call.1} parent=1 // pred_region
      _
    $region17: #{tpu_custom_call.1} parent=1 // pred_fallthru
      _
    // Predicated region
    $region18: #{tpu_custom_call.1} parent=1 // pred_check
      _
    $region19: #{tpu_custom_call.1} parent=1 // pred_check_branch
      %21 = sbr.rel (0) target = $region21
    $region20: #{tpu_custom_call.1} parent=1 // pred_region
      _
    $region21: #{tpu_custom_call.1} parent=1 // pred_fallthru
      _
    %v22 = vld [vmem:[%s1] sm:$0xff]
    %v23 = vld [vmem:[%s1 + $0x8] sm:$0xff]
    %v24 = vld [vmem:[%s1 + $0x10] sm:$0xff]
    %v25 = vld [vmem:[%s1 + $0x18] sm:$0xff]
    %v26 = vld [vmem:[%s1 + $0x20] sm:$0xff]
    %v27 = vld [vmem:[%s1 + $0x28] sm:$0xff]
    %v28 = vld [vmem:[%s1 + $0x30] sm:$0xff]
    %v29 = vld [vmem:[%s1 + $0x38] sm:$0xff]
    %v30 = vld [vmem:[%s1 + $0x40] sm:$0xff]
    %v31 = vld [vmem:[%s1 + $0x48] sm:$0xff]
    %v32 = vld [vmem:[%s1 + $0x50] sm:$0xff]
    %v33 = vld [vmem:[%s1 + $0x58] sm:$0xff]
    %v34 = vld [vmem:[%s1 + $0x60] sm:$0xff]
    %v35 = vld [vmem:[%s1 + $0x68] sm:$0xff]
    %v36 = vld [vmem:[%s1 + $0x70] sm:$0xff]
    %v37 = vld [vmem:[%s1 + $0x78] sm:$0xff]
    %v38 = vld [vmem:[%s2] sm:$0xff]
    %v39 = vld [vmem:[%s2 + $0x8] sm:$0xff]
    %v40 = vld [vmem:[%s2 + $0x10] sm:$0xff]
    %v41 = vld [vmem:[%s2 + $0x18] sm:$0xff]
    %v42 = vld [vmem:[%s2 + $0x20] sm:$0xff]
    %v43 = vld [vmem:[%s2 + $0x28] sm:$0xff]
    %v44 = vld [vmem:[%s2 + $0x30] sm:$0xff]
    %v45 = vld [vmem:[%s2 + $0x38] sm:$0xff]
    %v46 = vld [vmem:[%s2 + $0x40] sm:$0xff]
    %v47 = vld [vmem:[%s2 + $0x48] sm:$0xff]
    %v48 = vld [vmem:[%s2 + $0x50] sm:$0xff]
    %v49 = vld [vmem:[%s2 + $0x58] sm:$0xff]
    %v50 = vld [vmem:[%s2 + $0x60] sm:$0xff]
    %v51 = vld [vmem:[%s2 + $0x68] sm:$0xff]
    %v52 = vld [vmem:[%s2 + $0x70] sm:$0xff]
    %v53 = vld [vmem:[%s2 + $0x78] sm:$0xff]
    %54 = vxpose.xlu0.b32.start [1/16] %v22, 128
    %55 = vxpose.xlu0.b32.cont [2/16] %v24, 128
    %56 = vxpose.xlu0.b32.cont [3/16] %v26, 128
    %57 = vxpose.xlu0.b32.cont [4/16] %v28, 128
    %58 = vxpose.xlu0.b32.cont [5/16] %v30, 128
    %59 = vxpose.xlu0.b32.cont [6/16] %v32, 128
    %60 = vxpose.xlu0.b32.cont [7/16] %v34, 128
    %61 = vxpose.xlu0.b32.cont [8/16] %v36, 128
    %62 = vxpose.xlu0.b32.cont [9/16] 0.0, 128
    %63 = vxpose.xlu0.b32.cont [10/16] 0.0, 128
    %64 = vxpose.xlu0.b32.cont [11/16] 0.0, 128
    %65 = vxpose.xlu0.b32.cont [12/16] 0.0, 128
    %66 = vxpose.xlu0.b32.cont [13/16] 0.0, 128
    %67 = vxpose.xlu0.b32.cont [14/16] 0.0, 128
    %68 = vxpose.xlu0.b32.cont [15/16] 0.0, 128
    %69 = vxpose.xlu0.b32.end [16/16] 0.0, 128
    %v70 = vpop.trf.xlu0
    %v71 = vpop.trf.xlu0
    %v72 = vpop.trf.xlu0
    %v73 = vpop.trf.xlu0
    %v74 = vpop.trf.xlu0
    %v75 = vpop.trf.xlu0
    %v76 = vpop.trf.xlu0
    %v77 = vpop.trf.xlu0
    %v78 = vpop.trf.xlu0
    %v79 = vpop.trf.xlu0
    %v80 = vpop.trf.xlu0
    %v81 = vpop.trf.xlu0
    %v82 = vpop.trf.xlu0
    %v83 = vpop.trf.xlu0
    %v84 = vpop.trf.xlu0
    %v85 = vpop.trf.xlu0
    %86 = vxpose.xlu0.b32.start [1/16] %v23, 128
    %87 = vxpose.xlu0.b32.cont [2/16] %v25, 128
    %88 = vxpose.xlu0.b32.cont [3/16] %v27, 128
    %89 = vxpose.xlu0.b32.cont [4/16] %v29, 128
    %90 = vxpose.xlu0.b32.cont [5/16] %v31, 128
    %91 = vxpose.xlu0.b32.cont [6/16] %v33, 128
    %92 = vxpose.xlu0.b32.cont [7/16] %v35, 128
    %93 = vxpose.xlu0.b32.cont [8/16] %v37, 128
    %94 = vxpose.xlu0.b32.cont [9/16] 0.0, 128
    %95 = vxpose.xlu0.b32.cont [10/16] 0.0, 128
    %96 = vxpose.xlu0.b32.cont [11/16] 0.0, 128
    %97 = vxpose.xlu0.b32.cont [12/16] 0.0, 128
    %98 = vxpose.xlu0.b32.cont [13/16] 0.0, 128
    %99 = vxpose.xlu0.b32.cont [14/16] 0.0, 128
    %100 = vxpose.xlu0.b32.cont [15/16] 0.0, 128
    %101 = vxpose.xlu0.b32.end [16/16] 0.0, 128
    %v102 = vpop.trf.xlu0
    %v103 = vpop.trf.xlu0
    %v104 = vpop.trf.xlu0
    %v105 = vpop.trf.xlu0
    %v106 = vpop.trf.xlu0
    %v107 = vpop.trf.xlu0
    %v108 = vpop.trf.xlu0
    %v109 = vpop.trf.xlu0
    %v110 = vpop.trf.xlu0
    %v111 = vpop.trf.xlu0
    %v112 = vpop.trf.xlu0
    %v113 = vpop.trf.xlu0
    %v114 = vpop.trf.xlu0
    %v115 = vpop.trf.xlu0
    %v116 = vpop.trf.xlu0
    %v117 = vpop.trf.xlu0
    %vm118 = vcmask 523264
    %v120 = vsel %vm118, %v70, 0
    %v123 = vsel %vm118, %v71, 0
    %v126 = vsel %vm118, %v72, 0
    %v129 = vsel %vm118, %v73, 0
    %v132 = vsel %vm118, %v74, 0
    %v135 = vsel %vm118, %v75, 0
    %v138 = vsel %vm118, %v76, 0
    %v141 = vsel %vm118, %v77, 0
    %v144 = vsel %vm118, %v78, 0
    %v147 = vsel %vm118, %v79, 0
    %v150 = vsel %vm118, %v80, 0
    %v153 = vsel %vm118, %v81, 0
    %v156 = vsel %vm118, %v82, 0
    %v159 = vsel %vm118, %v83, 0
    %v162 = vsel %vm118, %v84, 0
    %v165 = vsel %vm118, %v85, 0
    %v168 = vsel %vm118, %v102, 0
    %v171 = vsel %vm118, %v103, 0
    %v174 = vsel %vm118, %v104, 0
    %v177 = vsel %vm118, %v105, 0
    %v180 = vsel %vm118, %v106, 0
    %v183 = vsel %vm118, %v107, 0
    %v186 = vsel %vm118, %v108, 0
    %v189 = vsel %vm118, %v109, 0
    %v192 = vsel %vm118, %v110, 0
    %v195 = vsel %vm118, %v111, 0
    %v198 = vsel %vm118, %v112, 0
    %v201 = vsel %vm118, %v113, 0
    %v204 = vsel %vm118, %v114, 0
    %v207 = vsel %vm118, %v115, 0
    %v210 = vsel %vm118, %v116, 0
    %v213 = vsel %vm118, %v117, 0
    %215 = vmatprep.subr.mxu0 %v39
    %216 = vmatpush1.msra.mxu0 %v38
    %217 = vmatprep.subr.mxu0 %v41
    %218 = vmatpush1.msra.mxu0 %v40
    %219 = vmatprep.subr.mxu0 %v43
    %220 = vmatpush1.msra.mxu0 %v42
    %221 = vmatprep.subr.mxu0 %v45
    %222 = vmatpush1.msra.mxu0 %v44
    %223 = vmatprep.subr.mxu0 %v47
    %224 = vmatpush1.msra.mxu0 %v46
    %225 = vmatprep.subr.mxu0 %v49
    %226 = vmatpush1.msra.mxu0 %v48
    %227 = vmatprep.subr.mxu0 %v51
    %228 = vmatpush1.msra.mxu0 %v50
    %229 = vmatprep.subr.mxu0 %v53
    %230 = vmatpush1.msra.mxu0 %v52
    %231 = vmatprep.subr.mxu0 0.0
    %232 = vmatpush1.msra.mxu0 0.0
    %233 = vmatprep.subr.mxu0 0.0
    %234 = vmatpush1.msra.mxu0 0.0
    %235 = vmatprep.subr.mxu0 0.0
    %236 = vmatpush1.msra.mxu0 0.0
    %237 = vmatprep.subr.mxu0 0.0
    %238 = vmatpush1.msra.mxu0 0.0
    %239 = vmatprep.subr.mxu0 0.0
    %240 = vmatpush1.msra.mxu0 0.0
    %241 = vmatprep.subr.mxu0 0.0
    %242 = vmatpush1.msra.mxu0 0.0
    %243 = vmatprep.subr.mxu0 0.0
    %244 = vmatpush1.msra.mxu0 0.0
    %245 = vmatprep.subr.mxu0 0.0
    %246 = vmatpush1.msra.mxu0 0.0
    %247 = vmatprep.subr.mxu0 0.0
    %248 = vmatpush1.msra.mxu0 0.0
    %249 = vmatprep.subr.mxu0 0.0
    %250 = vmatpush1.msra.mxu0 0.0
    %251 = vmatprep.subr.mxu0 0.0
    %252 = vmatpush1.msra.mxu0 0.0
    %253 = vmatprep.subr.mxu0 0.0
    %254 = vmatpush1.msra.mxu0 0.0
    %255 = vmatprep.subr.mxu0 0.0
    %256 = vmatpush1.msra.mxu0 0.0
    %257 = vmatprep.subr.mxu0 0.0
    %258 = vmatpush1.msra.mxu0 0.0
    %259 = vmatprep.subr.mxu0 0.0
    %260 = vmatpush1.msra.mxu0 0.0
    %261 = vmatprep.subr.mxu0 0.0
    %262 = vmatpush1.msra.mxu0 0.0
    %263 = vmatprep.subr.mxu0 0.0
    %264 = vmatpush1.msra.mxu0 0.0
    %265 = vmatprep.subr.mxu0 0.0
    %266 = vmatpush1.msra.mxu0 0.0
    %267 = vmatprep.subr.mxu0 0.0
    %268 = vmatpush1.msra.mxu0 0.0
    %269 = vmatprep.subr.mxu0 0.0
    %270 = vmatpush1.msra.mxu0 0.0
    %271 = vmatprep.subr.mxu0 0.0
    %272 = vmatpush1.msra.mxu0 0.0
    %273 = vmatprep.subr.mxu0 0.0
    %274 = vmatpush1.msra.mxu0 0.0
    %275 = vmatprep.subr.mxu0 0.0
    %276 = vmatpush1.msra.mxu0 0.0
    %277 = vmatprep.subr.mxu0 0.0
    %278 = vmatpush1.msra.mxu0 0.0
    %279 = vmatprep.mubr.f32.mxu0 0.0
    %280 = vmatmul.mubr.f32.gmra.mrb[0].mxu0 %v120
    %v281 = vpop.f32.mrb[0].mxu0
    %v282 = vadd.f32 0.0, %v281
    %v283 = vpop.f32.mrb[0].mxu0
    %v284 = vadd.f32 0.0, %v283
    %285 = vmatprep.mubr.f32.mxu0 0.0
    %286 = vmatmul.mubr.f32.gmra.mrb[0].mxu0 %v123
    %v287 = vpop.f32.mrb[0].mxu0
    %v288 = vadd.f32 0.0, %v287
    %v289 = vpop.f32.mrb[0].mxu0
    %v290 = vadd.f32 0.0, %v289
    %291 = vmatprep.mubr.f32.mxu0 0.0
    %292 = vmatmul.mubr.f32.gmra.mrb[0].mxu0 %v126
    %v293 = vpop.f32.mrb[0].mxu0
    %v294 = vadd.f32 0.0, %v293
    %v295 = vpop.f32.mrb[0].mxu0
    %v296 = vadd.f32 0.0, %v295
    %297 = vmatprep.mubr.f32.mxu0 0.0
    %298 = vmatmul.mubr.f32.gmra.mrb[0].mxu0 %v129
    %v299 = vpop.f32.mrb[0].mxu0
    %v300 = vadd.f32 0.0, %v299
    %v301 = vpop.f32.mrb[0].mxu0
    %v302 = vadd.f32 0.0, %v301
    %303 = vmatprep.mubr.f32.mxu0 0.0
    %304 = vmatmul.mubr.f32.gmra.mrb[0].mxu0 %v132
    %v305 = vpop.f32.mrb[0].mxu0
    %v306 = vadd.f32 0.0, %v305
    %v307 = vpop.f32.mrb[0].mxu0
    %v308 = vadd.f32 0.0, %v307
    %309 = vmatprep.mubr.f32.mxu0 0.0
    %310 = vmatmul.mubr.f32.gmra.mrb[0].mxu0 %v135
    %v311 = vpop.f32.mrb[0].mxu0
    %v312 = vadd.f32 0.0, %v311
    %v313 = vpop.f32.mrb[0].mxu0
    %v314 = vadd.f32 0.0, %v313
    %315 = vmatprep.mubr.f32.mxu0 0.0
    %316 = vmatmul.mubr.f32.gmra.mrb[0].mxu0 %v138
    %v317 = vpop.f32.mrb[0].mxu0
    %v318 = vadd.f32 0.0, %v317
    %v319 = vpop.f32.mrb[0].mxu0
    %v320 = vadd.f32 0.0, %v319
    %321 = vmatprep.mubr.f32.mxu0 0.0
    %322 = vmatmul.mubr.f32.gmra.mrb[0].mxu0 %v141
    %v323 = vpop.f32.mrb[0].mxu0
    %v324 = vadd.f32 0.0, %v323
    %v325 = vpop.f32.mrb[0].mxu0
    %v326 = vadd.f32 0.0, %v325
    %327 = vmatprep.mubr.f32.mxu0 0.0
    %328 = vmatmul.mubr.f32.gmra.mrb[0].mxu0 %v144
    %v329 = vpop.f32.mrb[0].mxu0
    %v330 = vadd.f32 0.0, %v329
    %v331 = vpop.f32.mrb[0].mxu0
    %v332 = vadd.f32 0.0, %v331
    %333 = vmatprep.mubr.f32.mxu0 0.0
    %334 = vmatmul.mubr.f32.gmra.mrb[0].mxu0 %v147
    %v335 = vpop.f32.mrb[0].mxu0
    %v336 = vadd.f32 0.0, %v335
    %v337 = vpop.f32.mrb[0].mxu0
    %v338 = vadd.f32 0.0, %v337
    %339 = vmatprep.mubr.f32.mxu0 0.0
    %340 = vmatmul.mubr.f32.gmra.mrb[0].mxu0 %v150
    %v341 = vpop.f32.mrb[0].mxu0
    %v342 = vadd.f32 0.0, %v341
    %v343 = vpop.f32.mrb[0].mxu0
    %v344 = vadd.f32 0.0, %v343
    %345 = vmatprep.mubr.f32.mxu0 0.0
    %346 = vmatmul.mubr.f32.gmra.mrb[0].mxu0 %v153
    %v347 = vpop.f32.mrb[0].mxu0
    %v348 = vadd.f32 0.0, %v347
    %v349 = vpop.f32.mrb[0].mxu0
    %v350 = vadd.f32 0.0, %v349
    %351 = vmatprep.mubr.f32.mxu0 0.0
    %352 = vmatmul.mubr.f32.gmra.mrb[0].mxu0 %v156
    %v353 = vpop.f32.mrb[0].mxu0
    %v354 = vadd.f32 0.0, %v353
    %v355 = vpop.f32.mrb[0].mxu0
    %v356 = vadd.f32 0.0, %v355
    %357 = vmatprep.mubr.f32.mxu0 0.0
    %358 = vmatmul.mubr.f32.gmra.mrb[0].mxu0 %v159
    %v359 = vpop.f32.mrb[0].mxu0
    %v360 = vadd.f32 0.0, %v359
    %v361 = vpop.f32.mrb[0].mxu0
    %v362 = vadd.f32 0.0, %v361
    %363 = vmatprep.mubr.f32.mxu0 0.0
    %364 = vmatmul.mubr.f32.gmra.mrb[0].mxu0 %v162
    %v365 = vpop.f32.mrb[0].mxu0
    %v366 = vadd.f32 0.0, %v365
    %v367 = vpop.f32.mrb[0].mxu0
    %v368 = vadd.f32 0.0, %v367
    %369 = vmatprep.mubr.f32.mxu0 0.0
    %370 = vmatmul.mubr.f32.gmra.mrb[0].mxu0 %v165
    %v371 = vpop.f32.mrb[0].mxu0
    %v372 = vadd.f32 0.0, %v371
    %v373 = vpop.f32.mrb[0].mxu0
    %v374 = vadd.f32 0.0, %v373
    %375 = vmatprep.mubr.f32.mxu0 0.0
    %376 = vmatmul.mubr.f32.gmra.mrb[0].mxu0 %v168
    %v377 = vpop.f32.mrb[0].mxu0
    %v378 = vadd.f32 0.0, %v377
    %v379 = vpop.f32.mrb[0].mxu0
    %v380 = vadd.f32 0.0, %v379
    %381 = vmatprep.mubr.f32.mxu0 0.0
    %382 = vmatmul.mubr.f32.gmra.mrb[0].mxu0 %v171
    %v383 = vpop.f32.mrb[0].mxu0
    %v384 = vadd.f32 0.0, %v383
    %v385 = vpop.f32.mrb[0].mxu0
    %v386 = vadd.f32 0.0, %v385
    %387 = vmatprep.mubr.f32.mxu0 0.0
    %388 = vmatmul.mubr.f32.gmra.mrb[0].mxu0 %v174
    %v389 = vpop.f32.mrb[0].mxu0
    %v390 = vadd.f32 0.0, %v389
    %v391 = vpop.f32.mrb[0].mxu0
    %v392 = vadd.f32 0.0, %v391
    %393 = vmatprep.mubr.f32.mxu0 0.0
    %394 = vmatmul.mubr.f32.gmra.mrb[0].mxu0 %v177
    %v395 = vpop.f32.mrb[0].mxu0
    %v396 = vadd.f32 0.0, %v395
    %v397 = vpop.f32.mrb[0].mxu0
    %v398 = vadd.f32 0.0, %v397
    %399 = vmatprep.mubr.f32.mxu0 0.0
    %400 = vmatmul.mubr.f32.gmra.mrb[0].mxu0 %v180
    %v401 = vpop.f32.mrb[0].mxu0
    %v402 = vadd.f32 0.0, %v401
    %v403 = vpop.f32.mrb[0].mxu0
    %v404 = vadd.f32 0.0, %v403
    %405 = vmatprep.mubr.f32.mxu0 0.0
    %406 = vmatmul.mubr.f32.gmra.mrb[0].mxu0 %v183
    %v407 = vpop.f32.mrb[0].mxu0
    %v408 = vadd.f32 0.0, %v407
    %v409 = vpop.f32.mrb[0].mxu0
    %v410 = vadd.f32 0.0, %v409
    %411 = vmatprep.mubr.f32.mxu0 0.0
    %412 = vmatmul.mubr.f32.gmra.mrb[0].mxu0 %v186
    %v413 = vpop.f32.mrb[0].mxu0
    %v414 = vadd.f32 0.0, %v413
    %v415 = vpop.f32.mrb[0].mxu0
    %v416 = vadd.f32 0.0, %v415
    %417 = vmatprep.mubr.f32.mxu0 0.0
    %418 = vmatmul.mubr.f32.gmra.mrb[0].mxu0 %v189
    %v419 = vpop.f32.mrb[0].mxu0
    %v420 = vadd.f32 0.0, %v419
    %v421 = vpop.f32.mrb[0].mxu0
    %v422 = vadd.f32 0.0, %v421
    %423 = vmatprep.mubr.f32.mxu0 0.0
    %424 = vmatmul.mubr.f32.gmra.mrb[0].mxu0 %v192
    %v425 = vpop.f32.mrb[0].mxu0
    %v426 = vadd.f32 0.0, %v425
    %v427 = vpop.f32.mrb[0].mxu0
    %v428 = vadd.f32 0.0, %v427
    %429 = vmatprep.mubr.f32.mxu0 0.0
    %430 = vmatmul.mubr.f32.gmra.mrb[0].mxu0 %v195
    %v431 = vpop.f32.mrb[0].mxu0
    %v432 = vadd.f32 0.0, %v431
    %v433 = vpop.f32.mrb[0].mxu0
    %v434 = vadd.f32 0.0, %v433
    %435 = vmatprep.mubr.f32.mxu0 0.0
    %436 = vmatmul.mubr.f32.gmra.mrb[0].mxu0 %v198
    %v437 = vpop.f32.mrb[0].mxu0
    %v438 = vadd.f32 0.0, %v437
    %v439 = vpop.f32.mrb[0].mxu0
    %v440 = vadd.f32 0.0, %v439
    %441 = vmatprep.mubr.f32.mxu0 0.0
    %442 = vmatmul.mubr.f32.gmra.mrb[0].mxu0 %v201
    %v443 = vpop.f32.mrb[0].mxu0
    %v444 = vadd.f32 0.0, %v443
    %v445 = vpop.f32.mrb[0].mxu0
    %v446 = vadd.f32 0.0, %v445
    %447 = vmatprep.mubr.f32.mxu0 0.0
    %448 = vmatmul.mubr.f32.gmra.mrb[0].mxu0 %v204
    %v449 = vpop.f32.mrb[0].mxu0
    %v450 = vadd.f32 0.0, %v449
    %v451 = vpop.f32.mrb[0].mxu0
    %v452 = vadd.f32 0.0, %v451
    %453 = vmatprep.mubr.f32.mxu0 0.0
    %454 = vmatmul.mubr.f32.gmra.mrb[0].mxu0 %v207
    %v455 = vpop.f32.mrb[0].mxu0
    %v456 = vadd.f32 0.0, %v455
    %v457 = vpop.f32.mrb[0].mxu0
    %v458 = vadd.f32 0.0, %v457
    %459 = vmatprep.mubr.f32.mxu0 0.0
    %460 = vmatmul.mubr.f32.gmra.mrb[0].mxu0 %v210
    %v461 = vpop.f32.mrb[0].mxu0
    %v462 = vadd.f32 0.0, %v461
    %v463 = vpop.f32.mrb[0].mxu0
    %v464 = vadd.f32 0.0, %v463
    %465 = vmatprep.mubr.f32.mxu0 0.0
    %466 = vmatmul.mubr.f32.gmra.mrb[0].mxu0 %v213
    %v467 = vpop.f32.mrb[0].mxu0
    %v468 = vadd.f32 0.0, %v467
    %v469 = vpop.f32.mrb[0].mxu0
    %v470 = vadd.f32 0.0, %v469
    %471 = vdwg.mxu0
    %v472 = vld [vmem:[%s3] sm:$0xff]
    %v473 = vld [vmem:[%s3 + $0x8] sm:$0xff]
    %v474 = vld [vmem:[%s3 + $0x10] sm:$0xff]
    %v475 = vld [vmem:[%s3 + $0x18] sm:$0xff]
    %v476 = vld [vmem:[%s3 + $0x20] sm:$0xff]
    %v477 = vld [vmem:[%s3 + $0x28] sm:$0xff]
    %v478 = vld [vmem:[%s3 + $0x30] sm:$0xff]
    %v479 = vld [vmem:[%s3 + $0x38] sm:$0xff]
    %v480 = vld [vmem:[%s3 + $0x40] sm:$0xff]
    %v481 = vld [vmem:[%s3 + $0x48] sm:$0xff]
    %v482 = vld [vmem:[%s3 + $0x50] sm:$0xff]
    %v483 = vld [vmem:[%s3 + $0x58] sm:$0xff]
    %v484 = vld [vmem:[%s3 + $0x60] sm:$0xff]
    %v485 = vld [vmem:[%s3 + $0x68] sm:$0xff]
    %v486 = vld [vmem:[%s3 + $0x70] sm:$0xff]
    %v487 = vld [vmem:[%s3 + $0x78] sm:$0xff]
    %v488 = vld [vmem:[%s3 + $0x80] sm:$0xff]
    %v489 = vld [vmem:[%s3 + $0x88] sm:$0xff]
    %v490 = vld [vmem:[%s3 + $0x90] sm:$0xff]
    %v491 = vld [vmem:[%s3 + $0x98] sm:$0xff]
    %v492 = vld [vmem:[%s3 + $0xa0] sm:$0xff]
    %v493 = vld [vmem:[%s3 + $0xa8] sm:$0xff]
    %v494 = vld [vmem:[%s3 + $0xb0] sm:$0xff]
    %v495 = vld [vmem:[%s3 + $0xb8] sm:$0xff]
    %v496 = vld [vmem:[%s3 + $0xc0] sm:$0xff]
    %v497 = vld [vmem:[%s3 + $0xc8] sm:$0xff]
    %v498 = vld [vmem:[%s3 + $0xd0] sm:$0xff]
    %v499 = vld [vmem:[%s3 + $0xd8] sm:$0xff]
    %v500 = vld [vmem:[%s3 + $0xe0] sm:$0xff]
    %v501 = vld [vmem:[%s3 + $0xe8] sm:$0xff]
    %v502 = vld [vmem:[%s3 + $0xf0] sm:$0xff]
    %v503 = vld [vmem:[%s3 + $0xf8] sm:$0xff]
    %v504 = vld [vmem:[%s4] sm:$0x3]
    %506 = vset.pattern.permute.xlu0 0
    %507 = vperm.xlu0 %506, %v472
    %v508 = vpop.permute.xlu0 %507
    %511 = vset.pattern.permute.xlu0 0
    %512 = vperm.xlu0 %511, %v473
    %v513 = vpop.permute.xlu0 %512
    %516 = vset.pattern.permute.xlu0 0
    %517 = vperm.xlu0 %516, %v474
    %v518 = vpop.permute.xlu0 %517
    %521 = vset.pattern.permute.xlu0 0
    %522 = vperm.xlu0 %521, %v475
    %v523 = vpop.permute.xlu0 %522
    %526 = vset.pattern.permute.xlu0 0
    %527 = vperm.xlu0 %526, %v476
    %v528 = vpop.permute.xlu0 %527
    %531 = vset.pattern.permute.xlu0 0
    %532 = vperm.xlu0 %531, %v477
    %v533 = vpop.permute.xlu0 %532
    %536 = vset.pattern.permute.xlu0 0
    %537 = vperm.xlu0 %536, %v478
    %v538 = vpop.permute.xlu0 %537
    %541 = vset.pattern.permute.xlu0 0
    %542 = vperm.xlu0 %541, %v479
    %v543 = vpop.permute.xlu0 %542
    %546 = vset.pattern.permute.xlu0 0
    %547 = vperm.xlu0 %546, %v480
    %v548 = vpop.permute.xlu0 %547
    %551 = vset.pattern.permute.xlu0 0
    %552 = vperm.xlu0 %551, %v481
    %v553 = vpop.permute.xlu0 %552
    %556 = vset.pattern.permute.xlu0 0
    %557 = vperm.xlu0 %556, %v482
    %v558 = vpop.permute.xlu0 %557
    %561 = vset.pattern.permute.xlu0 0
    %562 = vperm.xlu0 %561, %v483
    %v563 = vpop.permute.xlu0 %562
    %566 = vset.pattern.permute.xlu0 0
    %567 = vperm.xlu0 %566, %v484
    %v568 = vpop.permute.xlu0 %567
    %571 = vset.pattern.permute.xlu0 0
    %572 = vperm.xlu0 %571, %v485
    %v573 = vpop.permute.xlu0 %572
    %576 = vset.pattern.permute.xlu0 0
    %577 = vperm.xlu0 %576, %v486
    %v578 = vpop.permute.xlu0 %577
    %581 = vset.pattern.permute.xlu0 0
    %582 = vperm.xlu0 %581, %v487
    %v583 = vpop.permute.xlu0 %582
    %586 = vset.pattern.permute.xlu0 0
    %587 = vperm.xlu0 %586, %v488
    %v588 = vpop.permute.xlu0 %587
    %591 = vset.pattern.permute.xlu0 0
    %592 = vperm.xlu0 %591, %v489
    %v593 = vpop.permute.xlu0 %592
    %596 = vset.pattern.permute.xlu0 0
    %597 = vperm.xlu0 %596, %v490
    %v598 = vpop.permute.xlu0 %597
    %601 = vset.pattern.permute.xlu0 0
    %602 = vperm.xlu0 %601, %v491
    %v603 = vpop.permute.xlu0 %602
    %606 = vset.pattern.permute.xlu0 0
    %607 = vperm.xlu0 %606, %v492
    %v608 = vpop.permute.xlu0 %607
    %611 = vset.pattern.permute.xlu0 0
    %612 = vperm.xlu0 %611, %v493
    %v613 = vpop.permute.xlu0 %612
    %616 = vset.pattern.permute.xlu0 0
    %617 = vperm.xlu0 %616, %v494
    %v618 = vpop.permute.xlu0 %617
    %621 = vset.pattern.permute.xlu0 0
    %622 = vperm.xlu0 %621, %v495
    %v623 = vpop.permute.xlu0 %622
    %626 = vset.pattern.permute.xlu0 0
    %627 = vperm.xlu0 %626, %v496
    %v628 = vpop.permute.xlu0 %627
    %631 = vset.pattern.permute.xlu0 0
    %632 = vperm.xlu0 %631, %v497
    %v633 = vpop.permute.xlu0 %632
    %636 = vset.pattern.permute.xlu0 0
    %637 = vperm.xlu0 %636, %v498
    %v638 = vpop.permute.xlu0 %637
    %641 = vset.pattern.permute.xlu0 0
    %642 = vperm.xlu0 %641, %v499
    %v643 = vpop.permute.xlu0 %642
    %646 = vset.pattern.permute.xlu0 0
    %647 = vperm.xlu0 %646, %v500
    %v648 = vpop.permute.xlu0 %647
    %651 = vset.pattern.permute.xlu0 0
    %652 = vperm.xlu0 %651, %v501
    %v653 = vpop.permute.xlu0 %652
    %656 = vset.pattern.permute.xlu0 0
    %657 = vperm.xlu0 %656, %v502
    %v658 = vpop.permute.xlu0 %657
    %661 = vset.pattern.permute.xlu0 0
    %662 = vperm.xlu0 %661, %v503
    %v663 = vpop.permute.xlu0 %662
    %v666 = vlaneseq
    %v667 = vshrl.u32 %v666, 7
    %v668 = vsub.s32 0, %v667
    %v669 = vrot.slane %v504, %v668
    %v670 = vlaneseq
    %v671 = vshrl.u32 %v670, 7
    %v672 = vsub.s32 1, %v671
    %v673 = vrot.slane %v504, %v672
    %v676 = vadd.f32 %v508, %v669
    %v677 = vadd.f32 %v508, %v673
    %v678 = vadd.f32 %v513, %v669
    %v679 = vadd.f32 %v513, %v673
    %v680 = vadd.f32 %v518, %v669
    %v681 = vadd.f32 %v518, %v673
    %v682 = vadd.f32 %v523, %v669
    %v683 = vadd.f32 %v523, %v673
    %v684 = vadd.f32 %v528, %v669
    %v685 = vadd.f32 %v528, %v673
    %v686 = vadd.f32 %v533, %v669
    %v687 = vadd.f32 %v533, %v673
    %v688 = vadd.f32 %v538, %v669
    %v689 = vadd.f32 %v538, %v673
    %v690 = vadd.f32 %v543, %v669
    %v691 = vadd.f32 %v543, %v673
    %v692 = vadd.f32 %v548, %v669
    %v693 = vadd.f32 %v548, %v673
    %v694 = vadd.f32 %v553, %v669
    %v695 = vadd.f32 %v553, %v673
    %v696 = vadd.f32 %v558, %v669
    %v697 = vadd.f32 %v558, %v673
    %v698 = vadd.f32 %v563, %v669
    %v699 = vadd.f32 %v563, %v673
    %v700 = vadd.f32 %v568, %v669
    %v701 = vadd.f32 %v568, %v673
    %v702 = vadd.f32 %v573, %v669
    %v703 = vadd.f32 %v573, %v673
    %v704 = vadd.f32 %v578, %v669
    %v705 = vadd.f32 %v578, %v673
    %v706 = vadd.f32 %v583, %v669
    %v707 = vadd.f32 %v583, %v673
    %v708 = vadd.f32 %v588, %v669
    %v709 = vadd.f32 %v588, %v673
    %v710 = vadd.f32 %v593, %v669
    %v711 = vadd.f32 %v593, %v673
    %v712 = vadd.f32 %v598, %v669
    %v713 = vadd.f32 %v598, %v673
    %v714 = vadd.f32 %v603, %v669
    %v715 = vadd.f32 %v603, %v673
    %v716 = vadd.f32 %v608, %v669
    %v717 = vadd.f32 %v608, %v673
    %v718 = vadd.f32 %v613, %v669
    %v719 = vadd.f32 %v613, %v673
    %v720 = vadd.f32 %v618, %v669
    %v721 = vadd.f32 %v618, %v673
    %v722 = vadd.f32 %v623, %v669
    %v723 = vadd.f32 %v623, %v673
    %v724 = vadd.f32 %v628, %v669
    %v725 = vadd.f32 %v628, %v673
    %v726 = vadd.f32 %v633, %v669
    %v727 = vadd.f32 %v633, %v673
    %v728 = vadd.f32 %v638, %v669
    %v729 = vadd.f32 %v638, %v673
    %v730 = vadd.f32 %v643, %v669
    %v731 = vadd.f32 %v643, %v673
    %v732 = vadd.f32 %v648, %v669
    %v733 = vadd.f32 %v648, %v673
    %v734 = vadd.f32 %v653, %v669
    %v735 = vadd.f32 %v653, %v673
    %v736 = vadd.f32 %v658, %v669
    %v737 = vadd.f32 %v658, %v673
    %v738 = vadd.f32 %v663, %v669
    %v739 = vadd.f32 %v663, %v673
    %v740 = vmul.f32 %v282, 2.0
    %v741 = vmul.f32 %v284, 2.0
    %v742 = vmul.f32 %v288, 2.0
    %v743 = vmul.f32 %v290, 2.0
    %v744 = vmul.f32 %v294, 2.0
    %v745 = vmul.f32 %v296, 2.0
    %v746 = vmul.f32 %v300, 2.0
    %v747 = vmul.f32 %v302, 2.0
    %v748 = vmul.f32 %v306, 2.0
    %v749 = vmul.f32 %v308, 2.0
    %v750 = vmul.f32 %v312, 2.0
    %v751 = vmul.f32 %v314, 2.0
    %v752 = vmul.f32 %v318, 2.0
    %v753 = vmul.f32 %v320, 2.0
    %v754 = vmul.f32 %v324, 2.0
    %v755 = vmul.f32 %v326, 2.0
    %v756 = vmul.f32 %v330, 2.0
    %v757 = vmul.f32 %v332, 2.0
    %v758 = vmul.f32 %v336, 2.0
    %v759 = vmul.f32 %v338, 2.0
    %v760 = vmul.f32 %v342, 2.0
    %v761 = vmul.f32 %v344, 2.0
    %v762 = vmul.f32 %v348, 2.0
    %v763 = vmul.f32 %v350, 2.0
    %v764 = vmul.f32 %v354, 2.0
    %v765 = vmul.f32 %v356, 2.0
    %v766 = vmul.f32 %v360, 2.0
    %v767 = vmul.f32 %v362, 2.0
    %v768 = vmul.f32 %v366, 2.0
    %v769 = vmul.f32 %v368, 2.0
    %v770 = vmul.f32 %v372, 2.0
    %v771 = vmul.f32 %v374, 2.0
    %v772 = vmul.f32 %v378, 2.0
    %v773 = vmul.f32 %v380, 2.0
    %v774 = vmul.f32 %v384, 2.0
    %v775 = vmul.f32 %v386, 2.0
    %v776 = vmul.f32 %v390, 2.0
    %v777 = vmul.f32 %v392, 2.0
    %v778 = vmul.f32 %v396, 2.0
    %v779 = vmul.f32 %v398, 2.0
    %v780 = vmul.f32 %v402, 2.0
    %v781 = vmul.f32 %v404, 2.0
    %v782 = vmul.f32 %v408, 2.0
    %v783 = vmul.f32 %v410, 2.0
    %v784 = vmul.f32 %v414, 2.0
    %v785 = vmul.f32 %v416, 2.0
    %v786 = vmul.f32 %v420, 2.0
    %v787 = vmul.f32 %v422, 2.0
    %v788 = vmul.f32 %v426, 2.0
    %v789 = vmul.f32 %v428, 2.0
    %v790 = vmul.f32 %v432, 2.0
    %v791 = vmul.f32 %v434, 2.0
    %v792 = vmul.f32 %v438, 2.0
    %v793 = vmul.f32 %v440, 2.0
    %v794 = vmul.f32 %v444, 2.0
    %v795 = vmul.f32 %v446, 2.0
    %v796 = vmul.f32 %v450, 2.0
    %v797 = vmul.f32 %v452, 2.0
    %v798 = vmul.f32 %v456, 2.0
    %v799 = vmul.f32 %v458, 2.0
    %v800 = vmul.f32 %v462, 2.0
    %v801 = vmul.f32 %v464, 2.0
    %v802 = vmul.f32 %v468, 2.0
    %v803 = vmul.f32 %v470, 2.0
    %v804 = vsub.f32 %v676, %v740
    %v805 = vsub.f32 %v677, %v741
    %v806 = vsub.f32 %v678, %v742
    %v807 = vsub.f32 %v679, %v743
    %v808 = vsub.f32 %v680, %v744
    %v809 = vsub.f32 %v681, %v745
    %v810 = vsub.f32 %v682, %v746
    %v811 = vsub.f32 %v683, %v747
    %v812 = vsub.f32 %v684, %v748
    %v813 = vsub.f32 %v685, %v749
    %v814 = vsub.f32 %v686, %v750
    %v815 = vsub.f32 %v687, %v751
    %v816 = vsub.f32 %v688, %v752
    %v817 = vsub.f32 %v689, %v753
    %v818 = vsub.f32 %v690, %v754
    %v819 = vsub.f32 %v691, %v755
    %v820 = vsub.f32 %v692, %v756
    %v821 = vsub.f32 %v693, %v757
    %v822 = vsub.f32 %v694, %v758
    %v823 = vsub.f32 %v695, %v759
    %v824 = vsub.f32 %v696, %v760
    %v825 = vsub.f32 %v697, %v761
    %v826 = vsub.f32 %v698, %v762
    %v827 = vsub.f32 %v699, %v763
    %v828 = vsub.f32 %v700, %v764
    %v829 = vsub.f32 %v701, %v765
    %v830 = vsub.f32 %v702, %v766
    %v831 = vsub.f32 %v703, %v767
    %v832 = vsub.f32 %v704, %v768
    %v833 = vsub.f32 %v705, %v769
    %v834 = vsub.f32 %v706, %v770
    %v835 = vsub.f32 %v707, %v771
    %v836 = vsub.f32 %v708, %v772
    %v837 = vsub.f32 %v709, %v773
    %v838 = vsub.f32 %v710, %v774
    %v839 = vsub.f32 %v711, %v775
    %v840 = vsub.f32 %v712, %v776
    %v841 = vsub.f32 %v713, %v777
    %v842 = vsub.f32 %v714, %v778
    %v843 = vsub.f32 %v715, %v779
    %v844 = vsub.f32 %v716, %v780
    %v845 = vsub.f32 %v717, %v781
    %v846 = vsub.f32 %v718, %v782
    %v847 = vsub.f32 %v719, %v783
    %v848 = vsub.f32 %v720, %v784
    %v849 = vsub.f32 %v721, %v785
    %v850 = vsub.f32 %v722, %v786
    %v851 = vsub.f32 %v723, %v787
    %v852 = vsub.f32 %v724, %v788
    %v853 = vsub.f32 %v725, %v789
    %v854 = vsub.f32 %v726, %v790
    %v855 = vsub.f32 %v727, %v791
    %v856 = vsub.f32 %v728, %v792
    %v857 = vsub.f32 %v729, %v793
    %v858 = vsub.f32 %v730, %v794
    %v859 = vsub.f32 %v731, %v795
    %v860 = vsub.f32 %v732, %v796
    %v861 = vsub.f32 %v733, %v797
    %v862 = vsub.f32 %v734, %v798
    %v863 = vsub.f32 %v735, %v799
    %v864 = vsub.f32 %v736, %v800
    %v865 = vsub.f32 %v737, %v801
    %v866 = vsub.f32 %v738, %v802
    %v867 = vsub.f32 %v739, %v803
    %v868 = vmax.f32 %v804, 0.0
    %v869 = vmax.f32 %v805, 0.0
    %v870 = vmax.f32 %v806, 0.0
    %v871 = vmax.f32 %v807, 0.0
    %v872 = vmax.f32 %v808, 0.0
    %v873 = vmax.f32 %v809, 0.0
    %v874 = vmax.f32 %v810, 0.0
    %v875 = vmax.f32 %v811, 0.0
    %v876 = vmax.f32 %v812, 0.0
    %v877 = vmax.f32 %v813, 0.0
    %v878 = vmax.f32 %v814, 0.0
    %v879 = vmax.f32 %v815, 0.0
    %v880 = vmax.f32 %v816, 0.0
    %v881 = vmax.f32 %v817, 0.0
    %v882 = vmax.f32 %v818, 0.0
    %v883 = vmax.f32 %v819, 0.0
    %v884 = vmax.f32 %v820, 0.0
    %v885 = vmax.f32 %v821, 0.0
    %v886 = vmax.f32 %v822, 0.0
    %v887 = vmax.f32 %v823, 0.0
    %v888 = vmax.f32 %v824, 0.0
    %v889 = vmax.f32 %v825, 0.0
    %v890 = vmax.f32 %v826, 0.0
    %v891 = vmax.f32 %v827, 0.0
    %v892 = vmax.f32 %v828, 0.0
    %v893 = vmax.f32 %v829, 0.0
    %v894 = vmax.f32 %v830, 0.0
    %v895 = vmax.f32 %v831, 0.0
    %v896 = vmax.f32 %v832, 0.0
    %v897 = vmax.f32 %v833, 0.0
    %v898 = vmax.f32 %v834, 0.0
    %v899 = vmax.f32 %v835, 0.0
    %v900 = vmax.f32 %v836, 0.0
    %v901 = vmax.f32 %v837, 0.0
    %v902 = vmax.f32 %v838, 0.0
    %v903 = vmax.f32 %v839, 0.0
    %v904 = vmax.f32 %v840, 0.0
    %v905 = vmax.f32 %v841, 0.0
    %v906 = vmax.f32 %v842, 0.0
    %v907 = vmax.f32 %v843, 0.0
    %v908 = vmax.f32 %v844, 0.0
    %v909 = vmax.f32 %v845, 0.0
    %v910 = vmax.f32 %v846, 0.0
    %v911 = vmax.f32 %v847, 0.0
    %v912 = vmax.f32 %v848, 0.0
    %v913 = vmax.f32 %v849, 0.0
    %v914 = vmax.f32 %v850, 0.0
    %v915 = vmax.f32 %v851, 0.0
    %v916 = vmax.f32 %v852, 0.0
    %v917 = vmax.f32 %v853, 0.0
    %v918 = vmax.f32 %v854, 0.0
    %v919 = vmax.f32 %v855, 0.0
    %v920 = vmax.f32 %v856, 0.0
    %v921 = vmax.f32 %v857, 0.0
    %v922 = vmax.f32 %v858, 0.0
    %v923 = vmax.f32 %v859, 0.0
    %v924 = vmax.f32 %v860, 0.0
    %v925 = vmax.f32 %v861, 0.0
    %v926 = vmax.f32 %v862, 0.0
    %v927 = vmax.f32 %v863, 0.0
    %v928 = vmax.f32 %v864, 0.0
    %v929 = vmax.f32 %v865, 0.0
    %v930 = vmax.f32 %v866, 0.0
    %v931 = vmax.f32 %v867, 0.0
    %s932 = sld [smem:[#allocation2]]
    %s933 = ssub.f32 0.0, %s932
    %v934 = vstv %s933
    %v935 = vmul.f32 %v934, %v868
    %v936 = vmul.f32 %v934, %v869
    %v937 = vmul.f32 %v934, %v870
    %v938 = vmul.f32 %v934, %v871
    %v939 = vmul.f32 %v934, %v872
    %v940 = vmul.f32 %v934, %v873
    %v941 = vmul.f32 %v934, %v874
    %v942 = vmul.f32 %v934, %v875
    %v943 = vmul.f32 %v934, %v876
    %v944 = vmul.f32 %v934, %v877
    %v945 = vmul.f32 %v934, %v878
    %v946 = vmul.f32 %v934, %v879
    %v947 = vmul.f32 %v934, %v880
    %v948 = vmul.f32 %v934, %v881
    %v949 = vmul.f32 %v934, %v882
    %v950 = vmul.f32 %v934, %v883
    %v951 = vmul.f32 %v934, %v884
    %v952 = vmul.f32 %v934, %v885
    %v953 = vmul.f32 %v934, %v886
    %v954 = vmul.f32 %v934, %v887
    %v955 = vmul.f32 %v934, %v888
    %v956 = vmul.f32 %v934, %v889
    %v957 = vmul.f32 %v934, %v890
    %v958 = vmul.f32 %v934, %v891
    %v959 = vmul.f32 %v934, %v892
    %v960 = vmul.f32 %v934, %v893
    %v961 = vmul.f32 %v934, %v894
    %v962 = vmul.f32 %v934, %v895
    %v963 = vmul.f32 %v934, %v896
    %v964 = vmul.f32 %v934, %v897
    %v965 = vmul.f32 %v934, %v898
    %v966 = vmul.f32 %v934, %v899
    %v967 = vmul.f32 %v934, %v900
    %v968 = vmul.f32 %v934, %v901
    %v969 = vmul.f32 %v934, %v902
    %v970 = vmul.f32 %v934, %v903
    %v971 = vmul.f32 %v934, %v904
    %v972 = vmul.f32 %v934, %v905
    %v973 = vmul.f32 %v934, %v906
    %v974 = vmul.f32 %v934, %v907
    %v975 = vmul.f32 %v934, %v908
    %v976 = vmul.f32 %v934, %v909
    %v977 = vmul.f32 %v934, %v910
    %v978 = vmul.f32 %v934, %v911
    %v979 = vmul.f32 %v934, %v912
    %v980 = vmul.f32 %v934, %v913
    %v981 = vmul.f32 %v934, %v914
    %v982 = vmul.f32 %v934, %v915
    %v983 = vmul.f32 %v934, %v916
    %v984 = vmul.f32 %v934, %v917
    %v985 = vmul.f32 %v934, %v918
    %v986 = vmul.f32 %v934, %v919
    %v987 = vmul.f32 %v934, %v920
    %v988 = vmul.f32 %v934, %v921
    %v989 = vmul.f32 %v934, %v922
    %v990 = vmul.f32 %v934, %v923
    %v991 = vmul.f32 %v934, %v924
    %v992 = vmul.f32 %v934, %v925
    %v993 = vmul.f32 %v934, %v926
    %v994 = vmul.f32 %v934, %v927
    %v995 = vmul.f32 %v934, %v928
    %v996 = vmul.f32 %v934, %v929
    %v997 = vmul.f32 %v934, %v930
    %v998 = vmul.f32 %v934, %v931
    %v999 = vmul.f32 %v935, 1.442695
    %v1000 = vpow.pop %v999
    %v1001 = vmul.f32 %v936, 1.442695
    %v1002 = vpow.pop %v1001
    %v1003 = vmul.f32 %v937, 1.442695
    %v1004 = vpow.pop %v1003
    %v1005 = vmul.f32 %v938, 1.442695
    %v1006 = vpow.pop %v1005
    %v1007 = vmul.f32 %v939, 1.442695
    %v1008 = vpow.pop %v1007
    %v1009 = vmul.f32 %v940, 1.442695
    %v1010 = vpow.pop %v1009
    %v1011 = vmul.f32 %v941, 1.442695
    %v1012 = vpow.pop %v1011
    %v1013 = vmul.f32 %v942, 1.442695
    %v1014 = vpow.pop %v1013
    %v1015 = vmul.f32 %v943, 1.442695
    %v1016 = vpow.pop %v1015
    %v1017 = vmul.f32 %v944, 1.442695
    %v1018 = vpow.pop %v1017
    %v1019 = vmul.f32 %v945, 1.442695
    %v1020 = vpow.pop %v1019
    %v1021 = vmul.f32 %v946, 1.442695
    %v1022 = vpow.pop %v1021
    %v1023 = vmul.f32 %v947, 1.442695
    %v1024 = vpow.pop %v1023
    %v1025 = vmul.f32 %v948, 1.442695
    %v1026 = vpow.pop %v1025
    %v1027 = vmul.f32 %v949, 1.442695
    %v1028 = vpow.pop %v1027
    %v1029 = vmul.f32 %v950, 1.442695
    %v1030 = vpow.pop %v1029
    %v1031 = vmul.f32 %v951, 1.442695
    %v1032 = vpow.pop %v1031
    %v1033 = vmul.f32 %v952, 1.442695
    %v1034 = vpow.pop %v1033
    %v1035 = vmul.f32 %v953, 1.442695
    %v1036 = vpow.pop %v1035
    %v1037 = vmul.f32 %v954, 1.442695
    %v1038 = vpow.pop %v1037
    %v1039 = vmul.f32 %v955, 1.442695
    %v1040 = vpow.pop %v1039
    %v1041 = vmul.f32 %v956, 1.442695
    %v1042 = vpow.pop %v1041
    %v1043 = vmul.f32 %v957, 1.442695
    %v1044 = vpow.pop %v1043
    %v1045 = vmul.f32 %v958, 1.442695
    %v1046 = vpow.pop %v1045
    %v1047 = vmul.f32 %v959, 1.442695
    %v1048 = vpow.pop %v1047
    %v1049 = vmul.f32 %v960, 1.442695
    %v1050 = vpow.pop %v1049
    %v1051 = vmul.f32 %v961, 1.442695
    %v1052 = vpow.pop %v1051
    %v1053 = vmul.f32 %v962, 1.442695
    %v1054 = vpow.pop %v1053
    %v1055 = vmul.f32 %v963, 1.442695
    %v1056 = vpow.pop %v1055
    %v1057 = vmul.f32 %v964, 1.442695
    %v1058 = vpow.pop %v1057
    %v1059 = vmul.f32 %v965, 1.442695
    %v1060 = vpow.pop %v1059
    %v1061 = vmul.f32 %v966, 1.442695
    %v1062 = vpow.pop %v1061
    %v1063 = vmul.f32 %v967, 1.442695
    %v1064 = vpow.pop %v1063
    %v1065 = vmul.f32 %v968, 1.442695
    %v1066 = vpow.pop %v1065
    %v1067 = vmul.f32 %v969, 1.442695
    %v1068 = vpow.pop %v1067
    %v1069 = vmul.f32 %v970, 1.442695
    %v1070 = vpow.pop %v1069
    %v1071 = vmul.f32 %v971, 1.442695
    %v1072 = vpow.pop %v1071
    %v1073 = vmul.f32 %v972, 1.442695
    %v1074 = vpow.pop %v1073
    %v1075 = vmul.f32 %v973, 1.442695
    %v1076 = vpow.pop %v1075
    %v1077 = vmul.f32 %v974, 1.442695
    %v1078 = vpow.pop %v1077
    %v1079 = vmul.f32 %v975, 1.442695
    %v1080 = vpow.pop %v1079
    %v1081 = vmul.f32 %v976, 1.442695
    %v1082 = vpow.pop %v1081
    %v1083 = vmul.f32 %v977, 1.442695
    %v1084 = vpow.pop %v1083
    %v1085 = vmul.f32 %v978, 1.442695
    %v1086 = vpow.pop %v1085
    %v1087 = vmul.f32 %v979, 1.442695
    %v1088 = vpow.pop %v1087
    %v1089 = vmul.f32 %v980, 1.442695
    %v1090 = vpow.pop %v1089
    %v1091 = vmul.f32 %v981, 1.442695
    %v1092 = vpow.pop %v1091
    %v1093 = vmul.f32 %v982, 1.442695
    %v1094 = vpow.pop %v1093
    %v1095 = vmul.f32 %v983, 1.442695
    %v1096 = vpow.pop %v1095
    %v1097 = vmul.f32 %v984, 1.442695
    %v1098 = vpow.pop %v1097
    %v1099 = vmul.f32 %v985, 1.442695
    %v1100 = vpow.pop %v1099
    %v1101 = vmul.f32 %v986, 1.442695
    %v1102 = vpow.pop %v1101
    %v1103 = vmul.f32 %v987, 1.442695
    %v1104 = vpow.pop %v1103
    %v1105 = vmul.f32 %v988, 1.442695
    %v1106 = vpow.pop %v1105
    %v1107 = vmul.f32 %v989, 1.442695
    %v1108 = vpow.pop %v1107
    %v1109 = vmul.f32 %v990, 1.442695
    %v1110 = vpow.pop %v1109
    %v1111 = vmul.f32 %v991, 1.442695
    %v1112 = vpow.pop %v1111
    %v1113 = vmul.f32 %v992, 1.442695
    %v1114 = vpow.pop %v1113
    %v1115 = vmul.f32 %v993, 1.442695
    %v1116 = vpow.pop %v1115
    %v1117 = vmul.f32 %v994, 1.442695
    %v1118 = vpow.pop %v1117
    %v1119 = vmul.f32 %v995, 1.442695
    %v1120 = vpow.pop %v1119
    %v1121 = vmul.f32 %v996, 1.442695
    %v1122 = vpow.pop %v1121
    %v1123 = vmul.f32 %v997, 1.442695
    %v1124 = vpow.pop %v1123
    %v1125 = vmul.f32 %v998, 1.442695
    %v1126 = vpow.pop %v1125
    %1127 = vst [vmem:[#allocation3] sm:$0xff] %v1000
    %1128 = vst [vmem:[#allocation3 + $0x8] sm:$0xff] %v1002
    %1129 = vst [vmem:[#allocation3 + $0x10] sm:$0xff] %v1004
    %1130 = vst [vmem:[#allocation3 + $0x18] sm:$0xff] %v1006
    %1131 = vst [vmem:[#allocation3 + $0x20] sm:$0xff] %v1008
    %1132 = vst [vmem:[#allocation3 + $0x28] sm:$0xff] %v1010
    %1133 = vst [vmem:[#allocation3 + $0x30] sm:$0xff] %v1012
    %1134 = vst [vmem:[#allocation3 + $0x38] sm:$0xff] %v1014
    %1135 = vst [vmem:[#allocation3 + $0x40] sm:$0xff] %v1016
    %1136 = vst [vmem:[#allocation3 + $0x48] sm:$0xff] %v1018
    %1137 = vst [vmem:[#allocation3 + $0x50] sm:$0xff] %v1020
    %1138 = vst [vmem:[#allocation3 + $0x58] sm:$0xff] %v1022
    %1139 = vst [vmem:[#allocation3 + $0x60] sm:$0xff] %v1024
    %1140 = vst [vmem:[#allocation3 + $0x68] sm:$0xff] %v1026
    %1141 = vst [vmem:[#allocation3 + $0x70] sm:$0xff] %v1028
    %1142 = vst [vmem:[#allocation3 + $0x78] sm:$0xff] %v1030
    %1143 = vst [vmem:[#allocation3 + $0x80] sm:$0xff] %v1032
    %1144 = vst [vmem:[#allocation3 + $0x88] sm:$0xff] %v1034
    %1145 = vst [vmem:[#allocation3 + $0x90] sm:$0xff] %v1036
    %1146 = vst [vmem:[#allocation3 + $0x98] sm:$0xff] %v1038
    %1147 = vst [vmem:[#allocation3 + $0xa0] sm:$0xff] %v1040
    %1148 = vst [vmem:[#allocation3 + $0xa8] sm:$0xff] %v1042
    %1149 = vst [vmem:[#allocation3 + $0xb0] sm:$0xff] %v1044
    %1150 = vst [vmem:[#allocation3 + $0xb8] sm:$0xff] %v1046
    %1151 = vst [vmem:[#allocation3 + $0xc0] sm:$0xff] %v1048
    %1152 = vst [vmem:[#allocation3 + $0xc8] sm:$0xff] %v1050
    %1153 = vst [vmem:[#allocation3 + $0xd0] sm:$0xff] %v1052
    %1154 = vst [vmem:[#allocation3 + $0xd8] sm:$0xff] %v1054
    %1155 = vst [vmem:[#allocation3 + $0xe0] sm:$0xff] %v1056
    %1156 = vst [vmem:[#allocation3 + $0xe8] sm:$0xff] %v1058
    %1157 = vst [vmem:[#allocation3 + $0xf0] sm:$0xff] %v1060
    %1158 = vst [vmem:[#allocation3 + $0xf8] sm:$0xff] %v1062
    %1159 = vst [vmem:[#allocation3 + $0x100] sm:$0xff] %v1064
    %1160 = vst [vmem:[#allocation3 + $0x108] sm:$0xff] %v1066
    %1161 = vst [vmem:[#allocation3 + $0x110] sm:$0xff] %v1068
    %1162 = vst [vmem:[#allocation3 + $0x118] sm:$0xff] %v1070
    %1163 = vst [vmem:[#allocation3 + $0x120] sm:$0xff] %v1072
    %1164 = vst [vmem:[#allocation3 + $0x128] sm:$0xff] %v1074
    %1165 = vst [vmem:[#allocation3 + $0x130] sm:$0xff] %v1076
    %1166 = vst [vmem:[#allocation3 + $0x138] sm:$0xff] %v1078
    %1167 = vst [vmem:[#allocation3 + $0x140] sm:$0xff] %v1080
    %1168 = vst [vmem:[#allocation3 + $0x148] sm:$0xff] %v1082
    %1169 = vst [vmem:[#allocation3 + $0x150] sm:$0xff] %v1084
    %1170 = vst [vmem:[#allocation3 + $0x158] sm:$0xff] %v1086
    %1171 = vst [vmem:[#allocation3 + $0x160] sm:$0xff] %v1088
    %1172 = vst [vmem:[#allocation3 + $0x168] sm:$0xff] %v1090
    %1173 = vst [vmem:[#allocation3 + $0x170] sm:$0xff] %v1092
    %1174 = vst [vmem:[#allocation3 + $0x178] sm:$0xff] %v1094
    %1175 = vst [vmem:[#allocation3 + $0x180] sm:$0xff] %v1096
    %1176 = vst [vmem:[#allocation3 + $0x188] sm:$0xff] %v1098
    %1177 = vst [vmem:[#allocation3 + $0x190] sm:$0xff] %v1100
    %1178 = vst [vmem:[#allocation3 + $0x198] sm:$0xff] %v1102
    %1179 = vst [vmem:[#allocation3 + $0x1a0] sm:$0xff] %v1104
    %1180 = vst [vmem:[#allocation3 + $0x1a8] sm:$0xff] %v1106
    %1181 = vst [vmem:[#allocation3 + $0x1b0] sm:$0xff] %v1108
    %1182 = vst [vmem:[#allocation3 + $0x1b8] sm:$0xff] %v1110
    %1183 = vst [vmem:[#allocation3 + $0x1c0] sm:$0xff] %v1112
    %1184 = vst [vmem:[#allocation3 + $0x1c8] sm:$0xff] %v1114
    %1185 = vst [vmem:[#allocation3 + $0x1d0] sm:$0xff] %v1116
    %1186 = vst [vmem:[#allocation3 + $0x1d8] sm:$0xff] %v1118
    %1187 = vst [vmem:[#allocation3 + $0x1e0] sm:$0xff] %v1120
    %1188 = vst [vmem:[#allocation3 + $0x1e8] sm:$0xff] %v1122
    %1189 = vst [vmem:[#allocation3 + $0x1f0] sm:$0xff] %v1124
    %1190 = vst [vmem:[#allocation3 + $0x1f8] sm:$0xff] %v1126
    // Predicated region
    $region22: #{tpu_custom_call.1} parent=1 // pred_check
      _
    $region23: #{tpu_custom_call.1} parent=1 // pred_check_branch
      %1192 = sbr.rel (0) target = $region25
    $region24: #{tpu_custom_call.1} parent=1 // pred_region
      %s1194 = ssub.s32 8192, 8192
      %1195 = vsyncadd [#allocation4], %s1194
      %s1196 = sshll.u32 [#allocation3], 4
      %s1197 = int_to_ptr.vmem [resolvable:$true] %s1196
      %1202 = dma.vmem_to_hbm [thread:$0]  %s1197, 8192, %s5, [#allocation4], 256, 256, 16
    $region25: #{tpu_custom_call.1} parent=1 // pred_fallthru
      _
    // Predicated region
    $region26: #{tpu_custom_call.1} parent=1 // pred_check
      _
    $region27: #{tpu_custom_call.1} parent=1 // pred_check_branch
      %1204 = sbr.rel (0) target = $region29
    $region28: #{tpu_custom_call.1} parent=1 // pred_region
      %1205 = dma.done [#allocation4], 8192
    $region29: #{tpu_custom_call.1} parent=1 // pred_fallthru
      _
    %1206 = vsyncpa [#allocation4], 1

</llo_original>
